<compile_context>
chip_gen: v6e
topology: v6e:2x2x1
jax: 0.10.0
libtpu: 0.0.40
codegen_flags: <defaults>
</compile_context>

<pallas_src>
import jax
import jax.numpy as jnp
from jax.experimental import pallas as pl
from jax.experimental.pallas import tpu as pltpu

_LANE_CANDIDATES = (2048, 1024, 512, 256, 128)   # lane-dense widths (multiples of 128)
_TILE_BYTES = 8 * 1024 * 1024                    # per-tile byte budget
_VMEM_LIMIT = 48 * 1024 * 1024                   # 2 x (in+out) x 8 MiB = 32 MiB << 48 MiB
_FAST_PATH_ELEMENTS = 1 << 21                    # below ~2M elems, launch overhead dominates


def _scale_kernel(scale_ref, x_ref, o_ref):
    # scale_ref: (1,) f32 scalar-prefetch (SMEM); x_ref/o_ref: (tile_rows, lane) VMEM.
    # Multiply in f32 (torch keeps the parameter in f32), cast once at the store.
    o_ref[...] = (x_ref[...].astype(jnp.float32) * scale_ref[0]).astype(o_ref.dtype)


def _tile_rows(rows, lane, itemsize):
    """Row count per tile: ~_TILE_BYTES per tile, >=2 grid steps, sublane-aligned."""
    sub = max(8, 32 // itemsize)                  # sublane multiple: 8 f32, 16 bf16, 32 i8
    if rows <= 2 * sub:
        return rows                               # single tile == full dim (always legal)
    budget = max(sub, (_TILE_BYTES // (lane * itemsize)) // sub * sub)
    half = -(-((rows + 1) // 2) // sub) * sub     # ceil(rows/2) -> sub multiple: >=2 steps
    return max(sub, min(budget, half))


def _pallas_scale_2d(x2d, scale_1d):
    rows, lane = x2d.shape
    tile_rows = _tile_rows(rows, lane, x2d.dtype.itemsize)
    grid = (pl.cdiv(rows, tile_rows),)
    return pl.pallas_call(
        _scale_kernel,
        out_shape=jax.ShapeDtypeStruct(x2d.shape, x2d.dtype),
        grid_spec=pltpu.PrefetchScalarGridSpec(
            num_scalar_prefetch=1,
            grid=grid,
            in_specs=[pl.BlockSpec((tile_rows, lane), lambda i, s: (i, 0))],
            out_specs=pl.BlockSpec((tile_rows, lane), lambda i, s: (i, 0)),
        ),
        compiler_params=pltpu.CompilerParams(
            dimension_semantics=("parallel",),    # shard the stream across TCs on v7x
            vmem_limit_bytes=_VMEM_LIMIT,
        ),
    )(scale_1d, x2d)


def scale_forward(x, scale, *, min_pallas_elements=_FAST_PATH_ELEMENTS):
    """Computes x * scale (scalar parameter), matching torch Scale.forward."""
    orig_shape = x.shape
    n = x.size
    if n == 0:
        return x
    scale_f32 = jnp.asarray(scale, dtype=jnp.float32)

    # Largest lane width (multiple of 128) that divides the element count.
    lane = next((c for c in _LANE_CANDIDATES if n % c == 0), None)

    # Fast path: tiny tensors (FCOS per-level heads) or lane-unaligned counts.
    # A bare XLA multiply is bandwidth-optimal and lets XLA fuse it into the
    # adjacent op; avoids the old pad/slice extra-copy fallback entirely.
    # TODO(synk): a masked final-lane tile would let the kernel handle ragged
    # sizes in one pass; not needed since the XLA path is already at roofline.
    if n < min_pallas_elements or lane is None:
        return (x.astype(jnp.float32) * scale_f32).astype(x.dtype)

    out2d = _pallas_scale_2d(x.reshape(-1, lane), scale_f32.reshape(1))
    return out2d.reshape(orig_shape)


if __name__ == "__main__":
    key = jax.random.PRNGKey(0)
    k_small, k_big, k_odd = jax.random.split(key, 3)

    # Small FCOS-like NCHW tensor: batch=2, channels=4, spatial=16x16.
    x_small = jax.random.normal(k_small, (2, 4, 16, 16), dtype=jnp.float32)
    scale_one = jnp.array(1.0, dtype=jnp.float32)     # nn.init.constant_(scale, 1.0)

    # Default path for small tensors: fused XLA fast path.
    out_fast = scale_forward(x_small, scale_one)
    jax.block_until_ready(out_fast)
    assert out_fast.shape == x_small.shape and out_fast.dtype == x_small.dtype
    assert jnp.allclose(out_fast, x_small * scale_one)

    # Force the Pallas kernel on the small (lane-aligned) tensor: single-tile grid.
    out_kernel = scale_forward(x_small, jnp.array(2.5, jnp.float32), min_pallas_elements=0)
    jax.block_until_ready(out_kernel)
    assert out_kernel.shape == x_small.shape and out_kernel.dtype == x_small.dtype
    assert jnp.allclose(out_kernel, x_small * 2.5)

    # Larger lane-aligned tensor exercising the byte-budgeted, multi-step grid.
    x_big = jax.random.normal(k_big, (8, 64, 64, 64), dtype=jnp.float32)  # 2M elems, 8 MiB
    out_big = scale_forward(x_big, jnp.array(0.75, jnp.float32), min_pallas_elements=0)
    jax.block_until_ready(out_big)
    assert jnp.allclose(out_big, x_big * 0.75)

    # Lane-unaligned element count -> plain XLA multiply (no pad/slice copies).
    x_odd = jax.random.normal(k_odd, (3, 5, 7), dtype=jnp.float32)
    out_odd = scale_forward(x_odd, jnp.array(-1.25, jnp.float32))
    jax.block_until_ready(out_odd)
    assert jnp.allclose(out_odd, x_odd * -1.25)

    print("KERNEL_OK")
</pallas_src>

<mosaic_0001>
module attributes {stable_mosaic.version = 11 : i64} {
  func.func @_scale_kernel(%arg0: i32, %arg1: memref<1xf32, #tpu.memory_space<smem>>, %arg2: memref<1x2048xf32, #tpu.memory_space<vmem>>, %arg3: memref<1x2048xf32, #tpu.memory_space<vmem>>) attributes {dimension_semantics = [#tpu.dimension_semantics<parallel>], iteration_bounds = array<i64: 1>, scalar_prefetch = 1 : i64, scratch_operands = 0 : i64, tpu.core_type = #tpu.core_type<tc>, window_params = [{transform_indices = @transform_0, window_bounds = array<i64: 1, 2048>}, {transform_indices = @transform_1, window_bounds = array<i64: 1, 2048>}]} {
    %c0 = arith.constant 0 : index
    %c0_0 = arith.constant 0 : index
    %0 = vector.load %arg2[%c0, %c0_0] : memref<1x2048xf32, #tpu.memory_space<vmem>>, vector<1x2048xf32>
    %c0_1 = arith.constant 0 : index
    %1 = memref.load %arg1[%c0_1] : memref<1xf32, #tpu.memory_space<smem>>
    %2 = vector.broadcast %1 : f32 to vector<1x2048xf32>
    %3 = arith.mulf %0, %2 : vector<1x2048xf32>
    %c0_2 = arith.constant 0 : index
    %c0_3 = arith.constant 0 : index
    %4 = vector.load %arg3[%c0_2, %c0_3] : memref<1x2048xf32, #tpu.memory_space<vmem>>, vector<1x2048xf32>
    tpu.vector_store %arg3[%c0_2, %c0_3], %3 {strides = array<i32>} : memref<1x2048xf32, #tpu.memory_space<vmem>>, vector<1x2048xf32>,
    return
  }
  func.func @transform_0(%arg0: i32, %arg1: memref<1xf32, #tpu.memory_space<smem>>) -> (i32, i32) {
    %c0_i32 = arith.constant 0 : i32
    %c0_i32_0 = arith.constant 0 : i32
    return %arg0, %c0_i32 : i32, i32
  }
  func.func @transform_1(%arg0: i32, %arg1: memref<1xf32, #tpu.memory_space<smem>>) -> (i32, i32) {
    %c0_i32 = arith.constant 0 : i32
    %c0_i32_0 = arith.constant 0 : i32
    return %arg0, %c0_i32 : i32, i32
  }
}

</mosaic_0001>

<llo_original>
// kernel: tpu_custom_call.1
$region0: #{tpu_custom_call.1}
  #allocation0 [shape = 'u32[]', space=smem, size = 0x4, offset = 0x4, fixed_abs, tag = 'smem constant byte address 0x4 - core index']
  #allocation1 [shape = 'u32[144,128]{1,0:T(1,128)}', space=vmem, size = 0x12000, scoped, tag = 'internal scratch']
  #allocation2 [shape = 's32[1]{0}', space=sflag, size = 0x4, scoped, tag = 'scoped memory for tpu_custom_call.1']
  #allocation3 [shape = 'f32[1]{0:T(128)S(6)}', space=smem, size = 0x200, scoped, tag = 'prefetched SMEM operand 0']
  %s0 = inlined_call_operand.<no memory space> [shape: f32[1], index: 0, kind: input, shape index: {}]
  %s1 = inlined_call_operand.hbm [shape: f32[1,2048], index: 1, kind: input, shape index: {}]
  %s2 = inlined_call_operand.hbm [shape: f32[1,2048], index: 2, kind: output, shape index: {}]
  %s3 = sld [smem:[#allocation0]]
  $region18: #{tpu_custom_call.1} parent=0
    _
  %s5 = ssub.s32 1, %s3
  %s6 = scalar_select 0, %s5, %s3
  %7 = sst [smem:[#allocation3]] %s0
  $region1: #{tpu_custom_call.1} parent=0
    #allocation4 [shape = 'u8[8192]{0}', space=vmem, size = 0x2000, scoped, tag = 'input window, operand 1, single buffered']
    #allocation5 [shape = 's32[1]{0}', space=sflag, size = 0x4, scoped, tag = 'scoped memory for tpu_custom_call.1']
    #allocation6 [shape = 's32[1]{0}', space=sflag, size = 0x4, scoped, tag = 'scoped memory for tpu_custom_call.1']
    #allocation7 [shape = 'u8[8192]{0}', space=vmem, size = 0x2000, scoped, tag = 'output window, operand 0, single buffered']
    %8 = vsyncpa [#allocation5], 0
    %9 = vsyncpa [#allocation6], 0
    // Predicated region
    $region2: #{tpu_custom_call.1} parent=1 // pred_check
      _
    $region3: #{tpu_custom_call.1} parent=1 // pred_check_branch
      %11 = sbr.rel (0) target = $region5
    $region4: #{tpu_custom_call.1} parent=1 // pred_region
      %s13 = ssub.s32 256, 256
      %14 = vsyncadd [#allocation5], %s13
      %s16 = sshll.u32 [#allocation4], 4
      %s17 = int_to_ptr.vmem [resolvable:$true] %s16
      %19 = dma.hbm_to_vmem [thread:$0]  %s1, 256, %s17, [#allocation5]
    $region5: #{tpu_custom_call.1} parent=1 // pred_fallthru
      _
    // Predicated region
    $region6: #{tpu_custom_call.1} parent=1 // pred_check
      _
    $region7: #{tpu_custom_call.1} parent=1 // pred_check_branch
      %21 = sbr.rel (0) target = $region9
    $region8: #{tpu_custom_call.1} parent=1 // pred_region
      %22 = dma.done [#allocation5], 256
    $region9: #{tpu_custom_call.1} parent=1 // pred_fallthru
      _
    %v23 = vld [vmem:[#allocation4] sm:$0xff]
    %v24 = vld [vmem:[#allocation4 + $0x8] sm:$0xff]
    %s25 = sld [smem:[#allocation3]]
    %v26 = vstv %s25
    %v27 = vmul.f32 %v23, %v26
    %v28 = vmul.f32 %v24, %v26
    %29 = vst [vmem:[#allocation7] sm:$0xff] %v27
    %30 = vst [vmem:[#allocation7 + $0x8] sm:$0xff] %v28
    // Predicated region
    $region10: #{tpu_custom_call.1} parent=1 // pred_check
      _
    $region11: #{tpu_custom_call.1} parent=1 // pred_check_branch
      %32 = sbr.rel (0) target = $region13
    $region12: #{tpu_custom_call.1} parent=1 // pred_region
      %s34 = ssub.s32 256, 256
      %35 = vsyncadd [#allocation6], %s34
      %s37 = sshll.u32 [#allocation7], 4
      %s38 = int_to_ptr.vmem [resolvable:$true] %s37
      %40 = dma.vmem_to_hbm [thread:$0]  %s38, 256, %s2, [#allocation6]
    $region13: #{tpu_custom_call.1} parent=1 // pred_fallthru
      _
    // Predicated region
    $region14: #{tpu_custom_call.1} parent=1 // pred_check
      _
    $region15: #{tpu_custom_call.1} parent=1 // pred_check_branch
      %42 = sbr.rel (0) target = $region17
    $region16: #{tpu_custom_call.1} parent=1 // pred_region
      %43 = dma.done [#allocation6], 256
    $region17: #{tpu_custom_call.1} parent=1 // pred_fallthru
      _
    %44 = vsyncpa [#allocation5], 1
    %45 = vsyncpa [#allocation6], 1

</llo_original>
